<compile_context>
chip_gen: v5e
topology: v5e:2x2
jax: 0.10.0
libtpu: 0.0.40
codegen_flags: <defaults>
</compile_context>

<pallas_src>
import functools

import jax
import jax.numpy as jnp
from jax.experimental import pallas as pl
from jax.experimental.pallas import tpu as pltpu

EPS = 1e-5
CLAMP_LO = 0.05
CLAMP_HI = 20.0
LANE = 128


def _boundary_math(x):
    """x: (C, TR, L) f32 logits -> (probs_smooth (C,TR,L), loss_pix (TR,L))."""
    # my_softmax: clamp(softmax(x, dim=C), eps, 1) then renormalize over C.
    m = jnp.max(x, axis=0, keepdims=True)
    e = jnp.exp(x - m)
    p = e * pl.reciprocal(jnp.sum(e, axis=0, keepdims=True), approx=True)
    probs = jnp.clip(p, EPS, 1.0)
    probs = probs * pl.reciprocal(jnp.sum(probs, axis=0, keepdims=True), approx=True)

    # CRF post-processing (clamp-to-eps + channel renorm); the dense-CRF
    # inference itself is external (see module TODO).
    crf = jnp.maximum(probs, EPS)
    probs_smooth = crf * pl.reciprocal(jnp.sum(crf, axis=0, keepdims=True), approx=True)

    # Exact division here: log(ratio ~= 1) would amplify compounded approx-recip
    # error into absolute loss error; the denominators above stay approx (EUP).
    ratio = jnp.clip(probs_smooth / probs, CLAMP_LO, CLAMP_HI)
    loss_pix = jnp.sum(probs_smooth * jnp.log(ratio), axis=0)  # (TR, L)
    return probs_smooth, loss_pix


def _mask_padding(loss_pix, hw, tr, lane):
    """Zero the loss contribution of pixels past the true H*W extent."""
    row0 = pl.program_id(1) * tr
    row = jax.lax.broadcasted_iota(jnp.int32, loss_pix.shape, 0) + row0
    col = jax.lax.broadcasted_iota(jnp.int32, loss_pix.shape, 1)
    flat = row * lane + col
    return jnp.where(flat < hw, loss_pix, 0.0)


def _lane_partials(loss_pix):
    """(TR, L) -> (8, L) by summing groups of sublane rows (pure VPU adds).

    Keeps the loss store unmasked/lane-dense and avoids any cross-lane XLU
    reduce or scalar->(8,128) broadcast inside the kernel."""
    tr, l = loss_pix.shape
    return jnp.sum(loss_pix.reshape(tr // 8, 8, l), axis=0)


def _loss_only_kernel(x_ref, loss_ref, *, hw, tr, lane, need_mask):
    x = x_ref[...].astype(jnp.float32)          # (C, TR, L)
    _, loss_pix = _boundary_math(x)
    if need_mask:
        loss_pix = _mask_padding(loss_pix, hw, tr, lane)
    loss_ref[...] = _lane_partials(loss_pix)


def _loss_and_probs_kernel(x_ref, probs_ref, loss_ref, *, hw, tr, lane, need_mask):
    x = x_ref[...].astype(jnp.float32)          # (C, TR, L)
    probs_smooth, loss_pix = _boundary_math(x)
    probs_ref[...] = probs_smooth.astype(probs_ref.dtype)
    if need_mask:
        loss_pix = _mask_padding(loss_pix, hw, tr, lane)
    loss_ref[...] = _lane_partials(loss_pix)


def _vmem_plan(c):
    """Per-generation (vmem_limit_bytes, max tile rows).

    In-kernel f32 temporaries (~6-8 full blocks: e, p, probs, crf, probs_smooth,
    ratio, log term) plus double-buffered in/out blocks put true VMEM use at
    roughly 10-12x the block size, so the block budget stays well under
    vmem_limit / 12."""
    vmem_cap = 0
    try:
        vmem_cap = int(getattr(pltpu.get_tpu_info(), "vmem_capacity_bytes", 0) or 0)
    except Exception:
        vmem_cap = 0
    if vmem_cap >= 100 * 1024 * 1024:           # v5e / v6e: 128 MiB VMEM, HBM-bound
        vmem_limit = 96 * 1024 * 1024
        block_budget = 8 * 1024 * 1024
        max_rows = 2048
    else:                                       # v7x (64 MiB) or unknown: conservative
        vmem_limit = 48 * 1024 * 1024
        block_budget = 2 * 1024 * 1024
        max_rows = 1024
    cap = (block_budget // (c * LANE * 4)) // 8 * 8
    return vmem_limit, max(8, min(cap, max_rows))


def boundary_loss(images, predict, out_prob=False):
    """images: (N, 3, H, W) (consumed only by the external dense-CRF step),
       predict: (N, C, h, w), any float dtype.
       Returns scalar loss (and probs_smooth in predict's dtype)."""
    del images  # TODO(synk): used only by the external krahenbuhl2013 CRF.
    N, C, H, W = predict.shape
    HW = H * W

    rows_needed = -(-HW // LANE)
    vmem_limit, tr_cap = _vmem_plan(C)
    tr = min(tr_cap, -(-rows_needed // 8) * 8)          # multiple of 8 sublane rows
    n_tiles = -(-rows_needed // tr)
    # v7x megacore: make sure both TensorCores get work for tiny inputs.
    if N * n_tiles < 2 and tr > 8:
        half = -(-rows_needed // 2)
        tr = max(8, min(tr, -(-half // 8) * 8))
        n_tiles = -(-rows_needed // tr)
    rows = n_tiles * tr
    pad = rows * LANE - HW

    # Keep the input in its native dtype (bf16 halves the HBM read stream);
    # the kernel upcasts each block to f32 on the VPU.
    x = predict.reshape(N, C, HW)
    if pad:
        x = jnp.pad(x, ((0, 0), (0, 0), (0, pad)))
    x4 = x.reshape(N, C, rows, LANE)

    in_spec = pl.BlockSpec((None, C, tr, LANE), lambda n, t: (n, 0, t, 0))
    loss_spec = pl.BlockSpec((None, None, 8, LANE), lambda n, t: (n, t, 0, 0))
    loss_shape = jax.ShapeDtypeStruct((N, n_tiles, 8, LANE), jnp.float32)
    cparams = pltpu.CompilerParams(
        dimension_semantics=("parallel", "parallel"),
        vmem_limit_bytes=vmem_limit,
    )
    kw = dict(hw=HW, tr=tr, lane=LANE, need_mask=(pad != 0))

    if out_prob:
        probs_spec = pl.BlockSpec((None, C, tr, LANE), lambda n, t: (n, 0, t, 0))
        probs4, partials = pl.pallas_call(
            functools.partial(_loss_and_probs_kernel, **kw),
            out_shape=(
                jax.ShapeDtypeStruct((N, C, rows, LANE), predict.dtype),
                loss_shape,
            ),
            grid_spec=pltpu.PrefetchScalarGridSpec(
                num_scalar_prefetch=0,
                grid=(N, n_tiles),
                in_specs=[in_spec],
                out_specs=[probs_spec, loss_spec],
            ),
            compiler_params=cparams,
        )(x4)
        loss = jnp.sum(partials) / (N * HW)
        probs = probs4.reshape(N, C, rows * LANE)[:, :, :HW].reshape(N, C, H, W)
        return loss, probs

    # loss-only path: probs_smooth never touches HBM.
    partials = pl.pallas_call(
        functools.partial(_loss_only_kernel, **kw),
        out_shape=loss_shape,
        grid_spec=pltpu.PrefetchScalarGridSpec(
            num_scalar_prefetch=0,
            grid=(N, n_tiles),
            in_specs=[in_spec],
            out_specs=loss_spec,
        ),
        compiler_params=cparams,
    )(x4)
    return jnp.sum(partials) / (N * HW)


def _reference(predict):
    """Pure-JAX reference of the forward pass (CRF replaced by its
    clamp+renorm post-processing, matching the kernel)."""
    x = predict.astype(jnp.float32)
    p = jax.nn.softmax(x, axis=1)
    probs = jnp.clip(p, EPS, 1.0)
    probs = probs / jnp.sum(probs, axis=1, keepdims=True)
    crf = jnp.maximum(probs, EPS)
    probs_smooth = crf / jnp.sum(crf, axis=1, keepdims=True)
    ratio = jnp.clip(probs_smooth / probs, CLAMP_LO, CLAMP_HI)
    loss = jnp.mean(jnp.sum(probs_smooth * jnp.log(ratio), axis=1))
    return loss, probs_smooth


if __name__ == "__main__":
    key = jax.random.PRNGKey(0)
    k_img, k_pred = jax.random.split(key)
    N, C, H, W = 2, 4, 16, 16
    images = jax.random.uniform(k_img, (N, 3, H, W), dtype=jnp.float32)
    predict = jax.random.normal(k_pred, (N, C, H, W), dtype=jnp.float32)

    # f32 input path
    loss, probs_smooth = boundary_loss(images, predict, out_prob=True)
    loss_only = boundary_loss(images, predict, out_prob=False)
    loss = jax.block_until_ready(loss)
    probs_smooth = jax.block_until_ready(probs_smooth)
    loss_only = jax.block_until_ready(loss_only)

    ref_loss, ref_probs = _reference(predict)
    assert probs_smooth.shape == (N, C, H, W)
    assert probs_smooth.dtype == predict.dtype
    # approx (EUP) reciprocals in the kernel -> loosened tolerance vs exact f32 ref
    assert jnp.allclose(probs_smooth, ref_probs, atol=5e-3, rtol=5e-3), (
        float(jnp.max(jnp.abs(probs_smooth - ref_probs))))
    assert jnp.allclose(loss, ref_loss, atol=5e-3), (float(loss), float(ref_loss))
    assert jnp.allclose(loss_only, loss, atol=1e-6), (float(loss_only), float(loss))

    # bf16 input path (native-dtype I/O: halved HBM read & probs write streams)
    predict_bf16 = predict.astype(jnp.bfloat16)
    loss_bf, probs_bf = boundary_loss(images, predict_bf16, out_prob=True)
    loss_bf = jax.block_until_ready(loss_bf)
    probs_bf = jax.block_until_ready(probs_bf)
    ref_loss_bf, ref_probs_bf = _reference(predict_bf16)
    assert probs_bf.dtype == jnp.bfloat16
    assert jnp.allclose(probs_bf.astype(jnp.float32), ref_probs_bf,
                        atol=2e-2, rtol=2e-2), (
        float(jnp.max(jnp.abs(probs_bf.astype(jnp.float32) - ref_probs_bf))))
    assert jnp.allclose(loss_bf, ref_loss_bf, atol=1e-2), (
        float(loss_bf), float(ref_loss_bf))

    print("KERNEL_OK")
</pallas_src>

<mosaic_0001>
module attributes {stable_mosaic.version = 11 : i64} {
  func.func @_loss_and_probs_kernel(%arg0: i32, %arg1: i32, %arg2: memref<1x4x8x128xf32, #tpu.memory_space<vmem>>, %arg3: memref<1x4x8x128xf32, #tpu.memory_space<vmem>>, %arg4: memref<1x1x8x128xf32, #tpu.memory_space<vmem>>) attributes {dimension_semantics = [#tpu.dimension_semantics<parallel>, #tpu.dimension_semantics<parallel>], iteration_bounds = array<i64: 2, 1>, scalar_prefetch = 0 : i64, scratch_operands = 0 : i64, tpu.core_type = #tpu.core_type<tc>, window_params = [{transform_indices = @transform_0, window_bounds = array<i64: 1, 4, 8, 128>}, {transform_indices = @transform_1, window_bounds = array<i64: 1, 4, 8, 128>}, {transform_indices = @transform_2, window_bounds = array<i64: 1, 1, 8, 128>}]} {
    %c0 = arith.constant 0 : index
    %c0_0 = arith.constant 0 : index
    %c0_1 = arith.constant 0 : index
    %c0_2 = arith.constant 0 : index
    %0 = vector.load %arg2[%c0, %c0_0, %c0_1, %c0_2] : memref<1x4x8x128xf32, #tpu.memory_space<vmem>>, vector<1x4x8x128xf32>
    %1 = vector.shape_cast %0 : vector<1x4x8x128xf32> to vector<4x8x128xf32>
    %cst = arith.constant dense<0xFF800000> : vector<8x128xf32>
    %2 = vector.multi_reduction <maximumf>, %1, %cst [0] : vector<4x8x128xf32> to vector<8x128xf32>
    %3 = vector.shape_cast %2 : vector<8x128xf32> to vector<1x8x128xf32>
    %4 = vector.broadcast %3 : vector<1x8x128xf32> to vector<4x8x128xf32>
    %5 = arith.subf %1, %4 : vector<4x8x128xf32>
    %6 = math.exp %5 : vector<4x8x128xf32>
    %cst_3 = arith.constant dense<0.000000e+00> : vector<8x128xf32>
    %7 = vector.multi_reduction <add>, %6, %cst_3 [0] : vector<4x8x128xf32> to vector<8x128xf32>
    %8 = vector.shape_cast %7 : vector<8x128xf32> to vector<1x8x128xf32>
    %9 = tpu.reciprocal %8 {approx = true} : vector<1x8x128xf32> -> vector<1x8x128xf32>
    %10 = vector.broadcast %9 : vector<1x8x128xf32> to vector<4x8x128xf32>
    %11 = arith.mulf %6, %10 : vector<4x8x128xf32>
    %cst_4 = arith.constant 9.99999974E-6 : f32
    %cst_5 = arith.constant 1.000000e+00 : f32
    %12 = vector.broadcast %cst_4 : f32 to vector<4x8x128xf32>
    %13 = arith.maximumf %12, %11 : vector<4x8x128xf32>
    %14 = vector.broadcast %cst_5 : f32 to vector<4x8x128xf32>
    %15 = arith.minimumf %14, %13 : vector<4x8x128xf32>
    %cst_6 = arith.constant dense<0.000000e+00> : vector<8x128xf32>
    %16 = vector.multi_reduction <add>, %15, %cst_6 [0] : vector<4x8x128xf32> to vector<8x128xf32>
    %17 = vector.shape_cast %16 : vector<8x128xf32> to vector<1x8x128xf32>
    %18 = tpu.reciprocal %17 {approx = true} : vector<1x8x128xf32> -> vector<1x8x128xf32>
    %19 = vector.broadcast %18 : vector<1x8x128xf32> to vector<4x8x128xf32>
    %20 = arith.mulf %15, %19 : vector<4x8x128xf32>
    %cst_7 = arith.constant 9.99999974E-6 : f32
    %21 = vector.broadcast %cst_7 : f32 to vector<4x8x128xf32>
    %22 = arith.maximumf %20, %21 : vector<4x8x128xf32>
    %cst_8 = arith.constant dense<0.000000e+00> : vector<8x128xf32>
    %23 = vector.multi_reduction <add>, %22, %cst_8 [0] : vector<4x8x128xf32> to vector<8x128xf32>
    %24 = vector.shape_cast %23 : vector<8x128xf32> to vector<1x8x128xf32>
    %25 = tpu.reciprocal %24 {approx = true} : vector<1x8x128xf32> -> vector<1x8x128xf32>
    %26 = vector.broadcast %25 : vector<1x8x128xf32> to vector<4x8x128xf32>
    %27 = arith.mulf %22, %26 : vector<4x8x128xf32>
    %28 = arith.divf %27, %20 : vector<4x8x128xf32>
    %cst_9 = arith.constant 5.000000e-02 : f32
    %cst_10 = arith.constant 2.000000e+01 : f32
    %29 = vector.broadcast %cst_9 : f32 to vector<4x8x128xf32>
    %30 = arith.maximumf %29, %28 : vector<4x8x128xf32>
    %31 = vector.broadcast %cst_10 : f32 to vector<4x8x128xf32>
    %32 = arith.minimumf %31, %30 : vector<4x8x128xf32>
    %33 = math.log %32 : vector<4x8x128xf32>
    %34 = arith.mulf %27, %33 : vector<4x8x128xf32>
    %cst_11 = arith.constant dense<0.000000e+00> : vector<8x128xf32>
    %35 = vector.multi_reduction <add>, %34, %cst_11 [0] : vector<4x8x128xf32> to vector<8x128xf32>
    %c0_12 = arith.constant 0 : index
    %c0_13 = arith.constant 0 : index
    %c0_14 = arith.constant 0 : index
    %c0_15 = arith.constant 0 : index
    %36 = vector.load %arg3[%c0_12, %c0_13, %c0_14, %c0_15] : memref<1x4x8x128xf32, #tpu.memory_space<vmem>>, vector<1x4x8x128xf32>
    %37 = vector.shape_cast %36 : vector<1x4x8x128xf32> to vector<4x8x128xf32>
    %38 = vector.shape_cast %27 : vector<4x8x128xf32> to vector<1x4x8x128xf32>
    tpu.vector_store %arg3[%c0_12, %c0_13, %c0_14, %c0_15], %38 {strides = array<i32>} : memref<1x4x8x128xf32, #tpu.memory_space<vmem>>, vector<1x4x8x128xf32>,
    %c8_i32 = arith.constant 8 : i32
    %39 = arith.muli %arg1, %c8_i32 : i32
    %40 = tpu.iota {dimensions = array<i32: 0>} : vector<8x128xi32>
    %41 = vector.broadcast %39 : i32 to vector<8x128xi32>
    %42 = arith.addi %40, %41 : vector<8x128xi32>
    %43 = tpu.iota {dimensions = array<i32: 1>} : vector<8x128xi32>
    %c128_i32 = arith.constant 128 : i32
    %44 = vector.broadcast %c128_i32 : i32 to vector<8x128xi32>
    %45 = arith.muli %42, %44 : vector<8x128xi32>
    %46 = arith.addi %45, %43 : vector<8x128xi32>
    %c256_i32 = arith.constant 256 : i32
    %47 = vector.broadcast %c256_i32 : i32 to vector<8x128xi32>
    %48 = arith.cmpi slt, %46, %47 : vector<8x128xi32>
    %cst_16 = arith.constant 0.000000e+00 : f32
    %49 = vector.broadcast %cst_16 : f32 to vector<8x128xf32>
    %50 = arith.select %48, %35, %49 : vector<8x128xi1>, vector<8x128xf32>
    %51 = vector.shape_cast %50 : vector<8x128xf32> to vector<1x8x128xf32>
    %cst_17 = arith.constant dense<0.000000e+00> : vector<8x128xf32>
    %52 = vector.multi_reduction <add>, %51, %cst_17 [0] : vector<1x8x128xf32> to vector<8x128xf32>
    %c0_18 = arith.constant 0 : index
    %c0_19 = arith.constant 0 : index
    %c0_20 = arith.constant 0 : index
    %c0_21 = arith.constant 0 : index
    %53 = vector.load %arg4[%c0_18, %c0_19, %c0_20, %c0_21] : memref<1x1x8x128xf32, #tpu.memory_space<vmem>>, vector<1x1x8x128xf32>
    %54 = vector.shape_cast %53 : vector<1x1x8x128xf32> to vector<8x128xf32>
    %55 = vector.shape_cast %52 : vector<8x128xf32> to vector<1x1x8x128xf32>
    tpu.vector_store %arg4[%c0_18, %c0_19, %c0_20, %c0_21], %55 {strides = array<i32>} : memref<1x1x8x128xf32, #tpu.memory_space<vmem>>, vector<1x1x8x128xf32>,
    return
  }
  func.func @transform_0(%arg0: i32, %arg1: i32) -> (i32, i32, i32, i32) {
    %c0_i32 = arith.constant 0 : i32
    %c0_i32_0 = arith.constant 0 : i32
    %c0_i32_1 = arith.constant 0 : i32
    return %arg0, %c0_i32, %arg1, %c0_i32_0 : i32, i32, i32, i32
  }
  func.func @transform_1(%arg0: i32, %arg1: i32) -> (i32, i32, i32, i32) {
    %c0_i32 = arith.constant 0 : i32
    %c0_i32_0 = arith.constant 0 : i32
    %c0_i32_1 = arith.constant 0 : i32
    return %arg0, %c0_i32, %arg1, %c0_i32_0 : i32, i32, i32, i32
  }
  func.func @transform_2(%arg0: i32, %arg1: i32) -> (i32, i32, i32, i32) {
    %c0_i32 = arith.constant 0 : i32
    %c0_i32_0 = arith.constant 0 : i32
    %c0_i32_1 = arith.constant 0 : i32
    return %arg0, %arg1, %c0_i32, %c0_i32_0 : i32, i32, i32, i32
  }
}

</mosaic_0001>

<llo_original>
// kernel: tpu_custom_call.1
$region0: #{tpu_custom_call.1}
  #allocation0 [shape = 'u32[]', space=smem, size = 0x4, offset = 0x4, fixed_abs, tag = 'smem constant byte address 0x4 - core index']
  #allocation1 [shape = 'u32[72,128]{1,0:T(1,128)}', space=vmem, size = 0x9000, scoped, tag = 'internal scratch']
  %s0 = inlined_call_operand.hbm [shape: f32[2,4,8,128], index: 0, kind: input, shape index: {}]
  %s1 = inlined_call_operand.hbm [shape: f32[2,4,8,128], index: 1, kind: output, shape index: {0}]
  %s2 = inlined_call_operand.hbm [shape: f32[2,1,8,128], index: 2, kind: output, shape index: {1}]
  %3 = xla_tuple %s1, %s2
  %s4 = sld [smem:[#allocation0]]
  $region49: #{tpu_custom_call.1} parent=0
    _
  %s6 = ssub.s32 1, %s4
  %s7 = scalar_select 0, %s6, %s4
  $region1: #{tpu_custom_call.1} parent=0
    #allocation2 [shape = 'u8[32768]{0}', space=vmem, size = 0x8000, scoped, tag = 'input window, operand 0']
    #allocation3 [shape = 's32[2]{0}', space=sflag, size = 0x8, scoped, tag = 'scoped memory for tpu_custom_call.1']
    #allocation4 [shape = 's32[2]{0}', space=sflag, size = 0x8, scoped, tag = 'scoped memory for tpu_custom_call.1']
    #allocation5 [shape = 'u8[32768]{0}', space=vmem, size = 0x8000, scoped, tag = 'output window, operand 0']
    #allocation6 [shape = 'u8[8192]{0}', space=vmem, size = 0x2000, scoped, tag = 'output window, operand 1']
    #allocation7 [shape = 's32[2]{0}', space=sflag, size = 0x8, scoped, tag = 'scoped memory for tpu_custom_call.1']
    %8 = vsyncpa [#allocation3], 0
    %s9 = scalar_lea.sflag [#allocation3], 1
    %10 = vsyncpa %s9, 0
    %11 = vsyncpa [#allocation4], 0
    %s12 = scalar_lea.sflag [#allocation4], 1
    %13 = vsyncpa %s12, 0
    %14 = vsyncpa [#allocation7], 0
    %s15 = scalar_lea.sflag [#allocation7], 1
    %16 = vsyncpa %s15, 0
    loop: start=0, step=1, limit=4
    $region2: #{tpu_custom_call.1} parent=1 // loop_pre_header
      _
    $region3: #{tpu_custom_call.1} parent=1 // loop_header
      %s18 = sphi 0, %s22
      %p19 = scmp.ge.s32.totalorder %s18, 4
      %s25 = sphi 0, %s37
      %s26 = sphi 0, %s33
      %s27 = sphi 0, %s25
      %s28 = sphi 0, %s26
      %s29 = sphi 0, %s27
      %s30 = sphi 0, %s28
      %s42 = sphi 0, %s44
      %s45 = sphi 0, %s42
      %s46 = sphi 0, %s45
      %s62 = sphi 0, %s46
      %s70 = sphi 0, %s72
      %s73 = sphi 0, %s70
      %s74 = sphi 0, %s73
      %s90 = sphi 0, %s74
      %s98 = sphi 0, %s100
      %s101 = sphi 0, %s98
      %s102 = sphi 0, %s101
      %s118 = sphi 0, %s102
    $region4: #{tpu_custom_call.1} parent=1 // loop_header_branch
      %21 = sbr.rel (%p19) target = $region8
    $region5: #{tpu_custom_call.1} parent=1 // loop_body
      %s23 = ssub.s32 %s18, 1
      %s24 = ssub.s32 %s18, 2
      %s31 = sadd.s32 1, %s26
      %p32 = scmp.ge.s32.totalorder %s31, 1
      %s33 = scalar_select %p32, 0, %s31
      %s34 = sadd.s32 1, %s25
      %s35 = scalar_select %p32, %s34, %s25
      %p36 = scmp.ge.s32.totalorder %s35, 2
      %s37 = scalar_select %p36, 0, %s35
      %s38 = ssub.s32 %s25, %s37
      %s39 = ssub.s32 %s26, %s33
      %s40 = sor.u32 %s38, %s39
      %p41 = scmp.eq.s32.totalorder %s40, 0
      %s43 = sadd.s32 %s42, 1
      %s44 = scalar_select %p41, %s42, %s43
      %p47 = pneg %p41
      %p48 = scmp.eq.s32.totalorder %s18, 1
      %p49 = por %p47, %p48
      %p50 = scmp.ne.s32.totalorder %s42, %s45
      %p51 = scmp.eq.s32.totalorder %s18, 0
      %p52 = por %p50, %p51
      %p53 = scmp.ne.s32.totalorder %s42, %s45
      %p54 = scmp.eq.s32.totalorder %s23, 1
      %p55 = por %p53, %p54
      %p56 = scmp.ne.s32.totalorder %s45, %s46
      %p57 = scmp.eq.s32.totalorder %s23, 0
      %p58 = por %p56, %p57
      %p59 = scmp.ne.s32.totalorder %s45, %s46
      %p60 = scmp.eq.s32.totalorder %s24, 1
      %p61 = por %p59, %p60
      %p63 = scmp.ne.s32.totalorder %s46, %s62
      %p64 = scmp.eq.s32.totalorder %s24, 0
      %p65 = por %p63, %p64
      %s66 = ssub.s32 %s25, %s37
      %s67 = ssub.s32 %s26, %s33
      %s68 = sor.u32 %s66, %s67
      %p69 = scmp.eq.s32.totalorder %s68, 0
      %s71 = sadd.s32 %s70, 1
      %s72 = scalar_select %p69, %s70, %s71
      %p75 = pneg %p69
      %p76 = scmp.eq.s32.totalorder %s18, 1
      %p77 = por %p75, %p76
      %p78 = scmp.ne.s32.totalorder %s70, %s73
      %p79 = scmp.eq.s32.totalorder %s18, 0
      %p80 = por %p78, %p79
      %p81 = scmp.ne.s32.totalorder %s70, %s73
      %p82 = scmp.eq.s32.totalorder %s23, 1
      %p83 = por %p81, %p82
      %p84 = scmp.ne.s32.totalorder %s73, %s74
      %p85 = scmp.eq.s32.totalorder %s23, 0
      %p86 = por %p84, %p85
      %p87 = scmp.ne.s32.totalorder %s73, %s74
      %p88 = scmp.eq.s32.totalorder %s24, 1
      %p89 = por %p87, %p88
      %p91 = scmp.ne.s32.totalorder %s74, %s90
      %p92 = scmp.eq.s32.totalorder %s24, 0
      %p93 = por %p91, %p92
      %s94 = ssub.s32 %s25, %s37
      %s95 = ssub.s32 %s26, %s33
      %s96 = sor.u32 %s94, %s95
      %p97 = scmp.eq.s32.totalorder %s96, 0
      %s99 = sadd.s32 %s98, 1
      %s100 = scalar_select %p97, %s98, %s99
      %p103 = pneg %p97
      %p104 = scmp.eq.s32.totalorder %s18, 1
      %p105 = por %p103, %p104
      %p106 = scmp.ne.s32.totalorder %s98, %s101
      %p107 = scmp.eq.s32.totalorder %s18, 0
      %p108 = por %p106, %p107
      %p109 = scmp.ne.s32.totalorder %s98, %s101
      %p110 = scmp.eq.s32.totalorder %s23, 1
      %p111 = por %p109, %p110
      %p112 = scmp.ne.s32.totalorder %s101, %s102
      %p113 = scmp.eq.s32.totalorder %s23, 0
      %p114 = por %p112, %p113
      %p115 = scmp.ne.s32.totalorder %s101, %s102
      %p116 = scmp.eq.s32.totalorder %s24, 1
      %p117 = por %p115, %p116
      %p119 = scmp.ne.s32.totalorder %s102, %s118
      %p120 = scmp.eq.s32.totalorder %s24, 0
      %p121 = por %p119, %p120
      %p122 = scmp.le.s32.totalorder 1, %s18
      %p123 = scmp.lt.s32.totalorder %s18, 3
      %p124 = pnand %p122, %p123
      %p125 = pneg %p124
      // Predicated region
      $region9: #{tpu_custom_call.1} parent=5 // pred_check
        _
      $region10: #{tpu_custom_call.1} parent=5 // pred_check_branch
        %127 = sbr.rel (%p124) target = $region12
      $region11: #{tpu_custom_call.1} parent=5 // pred_region
        %s128 = ssub.s32 %s18, 1
      $region12: #{tpu_custom_call.1} parent=5 // pred_fallthru
        _
      %p129 = scmp.lt.s32.totalorder %s18, 2
      // Predicated region
      $region13: #{tpu_custom_call.1} parent=5 // pred_check
        %p130 = pneg %p129
      $region14: #{tpu_custom_call.1} parent=5 // pred_check_branch
        %132 = sbr.rel (%p130) target = $region16
      $region15: #{tpu_custom_call.1} parent=5 // pred_region
        // Predicated region
        $region17: #{tpu_custom_call.1} parent=15 // pred_check
          %p133 = pneg %p52
        $region18: #{tpu_custom_call.1} parent=15 // pred_check_branch
          %135 = sbr.rel (%p133) target = $region20
        $region19: #{tpu_custom_call.1} parent=15 // pred_region
          %s136 = sand.u32 %s42, 1
          %s137 = scalar_lea.sflag [#allocation3], %s136
          %s138 = sand.u32 %s42, 1
          %s139 = smul.addr %s138, 32
          %s140 = scalar_lea.vmem [#allocation2], %s139
          %142 = vsyncadd %s137, 0
          %s143 = smul.addr %s25, 4
          %s144 = sadd.s32 %s26, %s143
          %s145 = smul.addr %s144, 8
          %s146 = scalar_lea.hbm %s0, %s145
          %s147 = sshll.u32 %s146, 4
          %s148 = int_to_ptr.hbm [resolvable:$true] %s147
          %s149 = sshll.u32 %s140, 4
          %s150 = int_to_ptr.vmem [resolvable:$true] %s149
          %155 = dma.hbm_to_vmem [thread:$0]  %s148, 512, %s150, %s137, 128, 128, 8
        $region20: #{tpu_custom_call.1} parent=15 // pred_fallthru
          _
      $region16: #{tpu_custom_call.1} parent=5 // pred_fallthru
        _
      %p156 = scmp.le.s32.totalorder 1, %s18
      %p157 = scmp.lt.s32.totalorder %s18, 3
      %p158 = pnand %p156, %p157
      %p159 = pneg %p158
      // Predicated region
      $region21: #{tpu_custom_call.1} parent=5 // pred_check
        _
      $region22: #{tpu_custom_call.1} parent=5 // pred_check_branch
        %161 = sbr.rel (%p158) target = $region24
      $region23: #{tpu_custom_call.1} parent=5 // pred_region
        %s162 = ssub.s32 %s18, 1
        %s163 = sand.u32 %s45, 1
        %s164 = scalar_lea.sflag [#allocation3], %s163
        %s165 = sand.u32 %s45, 1
        %s166 = smul.addr %s165, 32
        %s167 = scalar_lea.vmem [#allocation2], %s166
        // Predicated region
        $region25: #{tpu_custom_call.1} parent=23 // pred_check
          %p168 = pneg %p58
        $region26: #{tpu_custom_call.1} parent=23 // pred_check_branch
          %170 = sbr.rel (%p168) target = $region28
        $region27: #{tpu_custom_call.1} parent=23 // pred_region
          %172 = dma.done %s164, 512
        $region28: #{tpu_custom_call.1} parent=23 // pred_fallthru
          _
        %s173 = sand.u32 %s45, 1
        %s174 = scalar_lea.sflag [#allocation3], %s173
        %s175 = sand.u32 %s45, 1
        %s176 = smul.addr %s175, 32
        %s177 = scalar_lea.vmem [#allocation2], %s176
        %p178 = pneg %p58
        %p179 = pneg %p55
        %p180 = pneg %p86
        %p181 = pneg %p83
        %s182 = sand.u32 %s73, 1
        %s183 = scalar_lea.sflag [#allocation4], %s182
        %s184 = sand.u32 %s73, 1
        %s185 = smul.addr %s184, 32
        %s186 = scalar_lea.vmem [#allocation5], %s185
        %p187 = pneg %p114
        %p188 = pneg %p111
        %s189 = sand.u32 %s101, 1
        %s190 = scalar_lea.sflag [#allocation7], %s189
        %s191 = sand.u32 %s101, 1
        %s192 = smul.addr %s191, 8
        %s193 = scalar_lea.vmem [#allocation6], %s192
        %v194 = vld [vmem:[%s167] sm:$0xff]
        %v195 = vld [vmem:[%s167 + $0x8] sm:$0xff]
        %v196 = vld [vmem:[%s167 + $0x10] sm:$0xff]
        %v197 = vld [vmem:[%s167 + $0x18] sm:$0xff]
        %v198 = vmax.f32 %v194, %v195
        %v199 = vmax.f32 %v196, %v197
        %v200 = vmax.f32 %v198, %v199
        %v201 = vsub.f32 %v194, %v200
        %v202 = vsub.f32 %v195, %v200
        %v203 = vsub.f32 %v196, %v200
        %v204 = vsub.f32 %v197, %v200
        %v205 = vmul.f32 %v201, 1.442695
        %v206 = vpow.pop %v205
        %v207 = vmul.f32 %v202, 1.442695
        %v208 = vpow.pop %v207
        %v209 = vmul.f32 %v203, 1.442695
        %v210 = vpow.pop %v209
        %v211 = vmul.f32 %v204, 1.442695
        %v212 = vpow.pop %v211
        %v213 = vadd.f32 %v206, %v208
        %v214 = vadd.f32 %v213, %v210
        %v215 = vadd.f32 %v214, %v212
        %v216 = vrcp.pop %v215
        %v217 = vmul.f32 %v206, %v216
        %v218 = vmul.f32 %v208, %v216
        %v219 = vmul.f32 %v210, %v216
        %v220 = vmul.f32 %v212, %v216
        %v221 = vmax.f32 %v217, 1e-05
        %v222 = vmax.f32 %v218, 1e-05
        %v223 = vmax.f32 %v219, 1e-05
        %v224 = vmax.f32 %v220, 1e-05
        %v225 = vmin.f32 %v221, 1.0
        %v226 = vmin.f32 %v222, 1.0
        %v227 = vmin.f32 %v223, 1.0
        %v228 = vmin.f32 %v224, 1.0
        %v229 = vadd.f32 %v225, %v226
        %v230 = vadd.f32 %v229, %v227
        %v231 = vadd.f32 %v230, %v228
        %v232 = vrcp.pop %v231
        %v233 = vmul.f32 %v225, %v232
        %v234 = vmul.f32 %v226, %v232
        %v235 = vmul.f32 %v227, %v232
        %v236 = vmul.f32 %v228, %v232
        %v237 = vmax.f32 %v233, 1e-05
        %v238 = vmax.f32 %v234, 1e-05
        %v239 = vmax.f32 %v235, 1e-05
        %v240 = vmax.f32 %v236, 1e-05
        %v241 = vadd.f32 %v237, %v238
        %v242 = vadd.f32 %v241, %v239
        %v243 = vadd.f32 %v242, %v240
        %v244 = vrcp.pop %v243
        %v245 = vmul.f32 %v237, %v244
        %v246 = vmul.f32 %v238, %v244
        %v247 = vmul.f32 %v239, %v244
        %v248 = vmul.f32 %v240, %v244
        %v249 = vrcp.pop %v233
        %v250 = vmul.f32 %v233, %v249
        %v251 = vsub.f32 1.0, %v250
        %v252 = vmul.f32 %v249, %v251
        %v253 = vadd.f32 %v249, %v252
        %vm254 = vweird.f32 %v233
        %vm255 = vweird.f32 %v249
        %vm256 = vmor %vm254, %vm255
        %v257 = vsel %vm256, %v249, %v253
        %v258 = vand.u32 2147483647, %v233
        %vm259 = vcmp.eq.f32.partialorder %v258, 8.507059e+37
        %v260 = vand.u32 %v233, 2147483648
        %v261 = vor.u32 1.1754944e-38, %v260
        %v262 = vsel %vm259, %v261, %v257
        %v263 = vmul.f32 %v245, %v262
        %v264 = vrcp.pop %v234
        %v265 = vmul.f32 %v234, %v264
        %v266 = vsub.f32 1.0, %v265
        %v267 = vmul.f32 %v264, %v266
        %v268 = vadd.f32 %v264, %v267
        %vm269 = vweird.f32 %v234
        %vm270 = vweird.f32 %v264
        %vm271 = vmor %vm269, %vm270
        %v272 = vsel %vm271, %v264, %v268
        %v273 = vand.u32 2147483647, %v234
        %vm274 = vcmp.eq.f32.partialorder %v273, 8.507059e+37
        %v275 = vand.u32 %v234, 2147483648
        %v276 = vor.u32 1.1754944e-38, %v275
        %v277 = vsel %vm274, %v276, %v272
        %v278 = vmul.f32 %v246, %v277
        %v279 = vrcp.pop %v235
        %v280 = vmul.f32 %v235, %v279
        %v281 = vsub.f32 1.0, %v280
        %v282 = vmul.f32 %v279, %v281
        %v283 = vadd.f32 %v279, %v282
        %vm284 = vweird.f32 %v235
        %vm285 = vweird.f32 %v279
        %vm286 = vmor %vm284, %vm285
        %v287 = vsel %vm286, %v279, %v283
        %v288 = vand.u32 2147483647, %v235
        %vm289 = vcmp.eq.f32.partialorder %v288, 8.507059e+37
        %v290 = vand.u32 %v235, 2147483648
        %v291 = vor.u32 1.1754944e-38, %v290
        %v292 = vsel %vm289, %v291, %v287
        %v293 = vmul.f32 %v247, %v292
        %v294 = vrcp.pop %v236
        %v295 = vmul.f32 %v236, %v294
        %v296 = vsub.f32 1.0, %v295
        %v297 = vmul.f32 %v294, %v296
        %v298 = vadd.f32 %v294, %v297
        %vm299 = vweird.f32 %v236
        %vm300 = vweird.f32 %v294
        %vm301 = vmor %vm299, %vm300
        %v302 = vsel %vm301, %v294, %v298
        %v303 = vand.u32 2147483647, %v236
        %vm304 = vcmp.eq.f32.partialorder %v303, 8.507059e+37
        %v305 = vand.u32 %v236, 2147483648
        %v306 = vor.u32 1.1754944e-38, %v305
        %v307 = vsel %vm304, %v306, %v302
        %v308 = vmul.f32 %v248, %v307
        %v309 = vmax.f32 %v263, 0.05
        %v310 = vmax.f32 %v278, 0.05
        %v311 = vmax.f32 %v293, 0.05
        %v312 = vmax.f32 %v308, 0.05
        %v313 = vmin.f32 %v309, 20.0
        %v314 = vmin.f32 %v310, 20.0
        %v315 = vmin.f32 %v311, 20.0
        %v316 = vmin.f32 %v312, 20.0
        %v317 = vlog2.pop %v313
        %v318 = vmul.f32 %v317, 0.6931472
        %v319 = vlog2.pop %v314
        %v320 = vmul.f32 %v319, 0.6931472
        %v321 = vlog2.pop %v315
        %v322 = vmul.f32 %v321, 0.6931472
        %v323 = vlog2.pop %v316
        %v324 = vmul.f32 %v323, 0.6931472
        %v325 = vmul.f32 %v245, %v318
        %v326 = vmul.f32 %v246, %v320
        %v327 = vmul.f32 %v247, %v322
        %v328 = vmul.f32 %v248, %v324
        %v329 = vadd.f32 %v325, %v326
        %v330 = vadd.f32 %v329, %v327
        %v331 = vadd.f32 %v330, %v328
        %332 = vst [vmem:[%s186] sm:$0xff] %v245
        %333 = vst [vmem:[%s186 + $0x8] sm:$0xff] %v246
        %334 = vst [vmem:[%s186 + $0x10] sm:$0xff] %v247
        %335 = vst [vmem:[%s186 + $0x18] sm:$0xff] %v248
        %s336 = smul.u32 %s28, 8
        %v337 = vlaneseq
        %v338 = vshrl.u32 %v337, 7
        %v339 = vstv %s336
        %v340 = vadd.s32 %v338, %v339
        %v341 = vlaneseq
        %v342 = vand.u32 %v341, 127
        %v343 = vmul.u32 %v340, 128
        %v344 = vadd.s32 %v343, %v342
        %vm345 = vcmp.lt.s32.totalorder %v344, 256
        %v346 = vsel %vm345, %v331, 0.0
        %v347 = vadd.f32 %v346, 0.0
        %348 = vst [vmem:[%s193] sm:$0xff] %v347
        %s349 = sand.u32 %s73, 1
        %s350 = scalar_lea.sflag [#allocation4], %s349
        %s351 = sand.u32 %s73, 1
        %s352 = smul.addr %s351, 32
        %s353 = scalar_lea.vmem [#allocation5], %s352
        %s354 = sand.u32 %s101, 1
        %s355 = scalar_lea.sflag [#allocation7], %s354
        %s356 = sand.u32 %s101, 1
        %s357 = smul.addr %s356, 8
        %s358 = scalar_lea.vmem [#allocation6], %s357
        // Predicated region
        $region29: #{tpu_custom_call.1} parent=23 // pred_check
          %p359 = pneg %p83
        $region30: #{tpu_custom_call.1} parent=23 // pred_check_branch
          %361 = sbr.rel (%p359) target = $region32
        $region31: #{tpu_custom_call.1} parent=23 // pred_region
          %363 = vsyncadd %s350, 0
          %s364 = smul.addr %s27, 4
          %s365 = sadd.s32 %s28, %s364
          %s366 = smul.addr %s365, 8
          %s367 = scalar_lea.hbm %s1, %s366
          %s368 = sshll.u32 %s353, 4
          %s369 = int_to_ptr.vmem [resolvable:$true] %s368
          %s370 = sshll.u32 %s367, 4
          %s371 = int_to_ptr.hbm [resolvable:$true] %s370
          %376 = dma.vmem_to_hbm [thread:$0]  %s369, 512, %s371, %s350, 128, 128, 8
        $region32: #{tpu_custom_call.1} parent=23 // pred_fallthru
          _
        // Predicated region
        $region33: #{tpu_custom_call.1} parent=23 // pred_check
          %p377 = pneg %p111
        $region34: #{tpu_custom_call.1} parent=23 // pred_check_branch
          %379 = sbr.rel (%p377) target = $region36
        $region35: #{tpu_custom_call.1} parent=23 // pred_region
          %381 = vsyncadd %s355, 0
          %s382 = sadd.s32 %s28, %s27
          %s383 = smul.addr %s382, 8
          %s384 = scalar_lea.hbm %s2, %s383
          %s386 = sshll.u32 %s358, 4
          %s387 = int_to_ptr.vmem [resolvable:$true] %s386
          %s388 = sshll.u32 %s384, 4
          %s389 = int_to_ptr.hbm [resolvable:$true] %s388
          %391 = dma.vmem_to_hbm [thread:$0]  %s387, 128, %s389, %s355
        $region36: #{tpu_custom_call.1} parent=23 // pred_fallthru
          _
      $region24: #{tpu_custom_call.1} parent=5 // pred_fallthru
        _
      %p392 = scmp.le.s32.totalorder 2, %s18
      // Predicated region
      $region37: #{tpu_custom_call.1} parent=5 // pred_check
        %p393 = pneg %p392
      $region38: #{tpu_custom_call.1} parent=5 // pred_check_branch
        %395 = sbr.rel (%p393) target = $region40
      $region39: #{tpu_custom_call.1} parent=5 // pred_region
        %s396 = ssub.s32 %s18, 2
        // Predicated region
        $region41: #{tpu_custom_call.1} parent=39 // pred_check
          %p397 = pneg %p89
        $region42: #{tpu_custom_call.1} parent=39 // pred_check_branch
          %399 = sbr.rel (%p397) target = $region44
        $region43: #{tpu_custom_call.1} parent=39 // pred_region
          %s400 = sand.u32 %s74, 1
          %s401 = scalar_lea.sflag [#allocation4], %s400
          %s402 = sand.u32 %s74, 1
          %s403 = smul.addr %s402, 32
          %s404 = scalar_lea.vmem [#allocation5], %s403
          %406 = dma.done %s401, 512
        $region44: #{tpu_custom_call.1} parent=39 // pred_fallthru
          _
        // Predicated region
        $region45: #{tpu_custom_call.1} parent=39 // pred_check
          %p407 = pneg %p117
        $region46: #{tpu_custom_call.1} parent=39 // pred_check_branch
          %409 = sbr.rel (%p407) target = $region48
        $region47: #{tpu_custom_call.1} parent=39 // pred_region
          %s410 = sand.u32 %s102, 1
          %s411 = scalar_lea.sflag [#allocation7], %s410
          %s412 = sand.u32 %s102, 1
          %s413 = smul.addr %s412, 8
          %s414 = scalar_lea.vmem [#allocation6], %s413
          %416 = dma.done %s411, 128
        $region48: #{tpu_custom_call.1} parent=39 // pred_fallthru
          _
      $region40: #{tpu_custom_call.1} parent=5 // pred_fallthru
        _
    $region6: #{tpu_custom_call.1} parent=1 // loop_footer
      %s22 = sadd.s32 1, %s18
    $region7: #{tpu_custom_call.1} parent=1 // loop_footer_branch
      %17 = sbr.rel target = $region3
    $region8: #{tpu_custom_call.1} parent=1 // loop_exit
      _
    %417 = vsyncpa [#allocation3], 1
    %s418 = scalar_lea.sflag [#allocation3], 1
    %419 = vsyncpa %s418, 1
    %420 = vsyncpa [#allocation4], 1
    %s421 = scalar_lea.sflag [#allocation4], 1
    %422 = vsyncpa %s421, 1
    %423 = vsyncpa [#allocation7], 1
    %s424 = scalar_lea.sflag [#allocation7], 1
    %425 = vsyncpa %s424, 1

</llo_original>
